<compile_context>
chip_gen: v5e
topology: v5e:2x2
jax: 0.10.0
libtpu: 0.0.40
codegen_flags: <defaults>
</compile_context>

<pallas_src>
import functools

import jax
import jax.numpy as jnp
from jax.experimental import pallas as pl
from jax.experimental.pallas import tpu as pltpu


def _flash_attention_kernel(xq_ref, xkv_ref, wq_ref, wkv_ref, o_ref,
                            q_scr, m_scr, l_scr, acc_scr,
                            *, out_pad, compute_dtype):
    """One (q_block, kv_block) grid step.

    xq_ref:  (tq, inp_dim)        compute_dtype  x rows for this q block
    xkv_ref: (tk, inp_dim)        compute_dtype  x rows for this kv block
    wq_ref:  (inp_dim, out_pad)   compute_dtype  W_query^T, 1/sqrt(d_k) folded in
    wkv_ref: (inp_dim, 2*out_pad) compute_dtype  [W_key^T | W_value^T] lane-padded
    o_ref:   (tq, out_pad)        f32            lane-dense output slab
    scratch: q (tq,out_pad) compute_dtype; m,l (tq,1) f32; acc (tq,out_pad) f32
    """
    kv_step = pl.program_id(1)

    @pl.when(kv_step == 0)
    def _():
        # Per-q-block init.  Q projected once; the scale is already folded into
        # wq, and the MXU result is emitted directly in compute_dtype.
        q_scr[...] = jnp.dot(xq_ref[...], wq_ref[...],
                             preferred_element_type=compute_dtype)
        m_scr[...] = jnp.full_like(m_scr, -jnp.inf)
        l_scr[...] = jnp.zeros_like(l_scr)
        acc_scr[...] = jnp.zeros_like(acc_scr)

    # Project only this K/V tile (fused lane-dense MXU matmul, compute_dtype).
    kv_proj = jnp.dot(xkv_ref[...], wkv_ref[...],
                      preferred_element_type=compute_dtype)      # (tk, 2*out_pad)
    k = kv_proj[:, :out_pad]
    v = kv_proj[:, out_pad:]

    # Scores: contract the feature dim of q and k directly (NT matmul).
    # TODO(synk): confirm with pl.lower_as_mlir that Mosaic does not insert an
    # XLU relayout of k for this contraction; restructure if it does.
    s = jax.lax.dot_general(q_scr[...], k,
                            dimension_numbers=(((1,), (1,)), ((), ())),
                            preferred_element_type=jnp.float32)   # (tq, tk)

    # Online softmax with DEFERRED normalization (f32 statistics).
    # TODO(synk): on v6e/v7x the exp could run in bf16 (single EUP is the
    # saturating slot at d=128); kept f32 here so the same kernel is v5e-safe.
    m_new = jnp.maximum(m_scr[...], jnp.max(s, axis=-1, keepdims=True))
    alpha = jnp.exp(m_scr[...] - m_new)
    p = jnp.exp(s - m_new)                                        # unnormalized
    l_scr[...] = alpha * l_scr[...] + jnp.sum(p, axis=-1, keepdims=True)
    acc_scr[...] = alpha * acc_scr[...] + jnp.dot(
        p.astype(compute_dtype), v, preferred_element_type=jnp.float32)
    m_scr[...] = m_new

    @pl.when(kv_step == pl.num_programs(1) - 1)
    def _():
        # Deferred normalization: one (tq, out_pad) multiply via EUP reciprocal.
        o_ref[...] = (acc_scr[...] *
                      pl.reciprocal(l_scr[...], approx=True)).astype(o_ref.dtype)


def _pick_tile(seq, cap=256):
    """Largest divisor of seq that is a multiple of 8 and <= cap (else seq).

    cap=256 is safe across v5e (16 MiB scoped VMEM default) / v6e / v7x (64 MiB
    physical VMEM); raise to 512 on v6e if the attention part is MXU-bound.
    """
    if seq <= cap:
        return seq
    for t in range(cap, 7, -1):
        if seq % t == 0 and t % 8 == 0:
            return t
    return seq   # fall back to a single block along this axis


def prepare_qkv_weights(w_query, w_key, w_value, *, compute_dtype=jnp.bfloat16):
    """Transpose / scale / pad / fuse the nn.Linear weights.

    Pure weight plumbing — hoist out of the step function in real use so it
    runs only when the weights change, not on every forward.
    """
    out_dim, _ = w_query.shape
    out_pad = pl.cdiv(out_dim, 128) * 128          # lane-dense padded width
    scale = 1.0 / float(out_dim) ** 0.5            # == 1 / key.shape[-1] ** 0.5

    def _prep(w, s=1.0):
        wt = (w * jnp.float32(s)).T                # (inp_dim, out_dim)
        wt = jnp.pad(wt, ((0, 0), (0, out_pad - out_dim)))
        return wt.astype(compute_dtype)

    w_q = _prep(w_query, scale)                                   # (inp, out_pad)
    w_kv = jnp.concatenate([_prep(w_key), _prep(w_value)], axis=1)  # (inp, 2*out_pad)
    return w_q, w_kv, out_dim, out_pad


def self_attention_v1(x, w_query, w_key, w_value, *,
                      compute_dtype=jnp.bfloat16, tq=None, tk=None):
    """Pallas forward matching SelfAttentionV1 (qkv_bias=False).

    Args:
      x:        (seq, inp_dim) float32
      w_query, w_key, w_value: (out_dim, inp_dim)  PyTorch nn.Linear layout
      compute_dtype: MXU operand dtype (bf16 default; f32 accumulation).
    Returns:
      (seq, out_dim) context vectors in x.dtype.
    """
    seq, inp_dim = x.shape
    w_q, w_kv, out_dim, out_pad = prepare_qkv_weights(
        w_query, w_key, w_value, compute_dtype=compute_dtype)

    tq = tq or _pick_tile(seq)
    tk = tk or _pick_tile(seq)
    assert seq % tq == 0 and seq % tk == 0, "tile must divide seq"
    # TODO(synk): if seq is not sublane-aligned, pad QUERY rows only in the
    # wrapper (padding key/value rows would need a -inf mask before softmax).

    grid = (seq // tq, seq // tk)

    x_c = x.astype(compute_dtype)   # downcast once; halves x DMA bytes for bf16

    kernel = functools.partial(_flash_attention_kernel,
                               out_pad=out_pad, compute_dtype=compute_dtype)

    out_padded = pl.pallas_call(
        kernel,
        out_shape=jax.ShapeDtypeStruct((seq, out_pad), x.dtype),
        grid_spec=pltpu.PrefetchScalarGridSpec(
            num_scalar_prefetch=0,
            grid=grid,
            in_specs=[
                pl.BlockSpec((tq, inp_dim), lambda i, j: (i, 0)),          # x -> Q
                pl.BlockSpec((tk, inp_dim), lambda i, j: (j, 0)),          # x -> K,V
                pl.BlockSpec((inp_dim, out_pad), lambda i, j: (0, 0)),     # W_q
                pl.BlockSpec((inp_dim, 2 * out_pad), lambda i, j: (0, 0)),  # W_kv
            ],
            out_specs=pl.BlockSpec((tq, out_pad), lambda i, j: (i, 0)),
            scratch_shapes=[
                pltpu.VMEM((tq, out_pad), compute_dtype),   # projected Q block
                pltpu.VMEM((tq, 1), jnp.float32),           # running row max
                pltpu.VMEM((tq, 1), jnp.float32),           # running denominator
                pltpu.VMEM((tq, out_pad), jnp.float32),     # running context acc
            ]),
        compiler_params=pltpu.CompilerParams(
            dimension_semantics=("parallel", "arbitrary")),
    )(x_c, x_c, w_q, w_kv)

    # Slice back to the real width.  Under jit this fuses with the consumer;
    # downstream code that can consume the lane-padded slab should skip it.
    return out_padded[:, :out_dim]


def _reference(x, w_query, w_key, w_value):
    """Pure-JAX f32 reference mirroring the PyTorch forward exactly."""
    q = x @ w_query.T
    k = x @ w_key.T
    v = x @ w_value.T
    s = q @ k.T
    w = jax.nn.softmax(s / jnp.sqrt(jnp.float32(k.shape[-1])), axis=-1)
    return w @ v


if __name__ == "__main__":
    key = jax.random.PRNGKey(0)
    seq, inp_dim, out_dim = 8, 32, 16

    k_x, k_q, k_k, k_v = jax.random.split(key, 4)
    x = jax.random.normal(k_x, (seq, inp_dim), dtype=jnp.float32)

    # Deterministic parameter init (qkv_bias=False => no bias terms).
    # nn.Linear weight shape (out_dim, inp_dim); uniform(-b, b), b = 1/sqrt(fan_in).
    bound = 1.0 / jnp.sqrt(jnp.float32(inp_dim))
    w_query = jax.random.uniform(k_q, (out_dim, inp_dim), jnp.float32, -bound, bound)
    w_key   = jax.random.uniform(k_k, (out_dim, inp_dim), jnp.float32, -bound, bound)
    w_value = jax.random.uniform(k_v, (out_dim, inp_dim), jnp.float32, -bound, bound)

    ref = _reference(x, w_query, w_key, w_value)

    # f32 MXU path (approx reciprocal is the only source of deviation).
    out_f32 = self_attention_v1(x, w_query, w_key, w_value,
                                compute_dtype=jnp.float32)
    out_f32 = jax.block_until_ready(out_f32)
    assert out_f32.shape == (seq, out_dim)
    assert jnp.allclose(out_f32, ref, atol=5e-3, rtol=5e-3), "f32 path mismatch"

    # Default bf16-operand path (v6e/v7x-friendly), f32 accumulation on MXU.
    out_bf16 = self_attention_v1(x, w_query, w_key, w_value)
    out_bf16 = jax.block_until_ready(out_bf16)
    assert out_bf16.shape == (seq, out_dim)
    assert jnp.allclose(out_bf16, ref, atol=5e-2, rtol=5e-2), "bf16 path mismatch"

    print("KERNEL_OK")
</pallas_src>

<mosaic_0001>
module attributes {stable_mosaic.version = 11 : i64} {
  func.func @_flash_attention_kernel(%arg0: i32, %arg1: i32, %arg2: memref<8x32xf32, #tpu.memory_space<vmem>>, %arg3: memref<8x32xf32, #tpu.memory_space<vmem>>, %arg4: memref<32x128xf32, #tpu.memory_space<vmem>>, %arg5: memref<32x256xf32, #tpu.memory_space<vmem>>, %arg6: memref<8x128xf32, #tpu.memory_space<vmem>>, %arg7: memref<8x128xf32, #tpu.memory_space<vmem>>, %arg8: memref<8x1xf32, #tpu.memory_space<vmem>>, %arg9: memref<8x1xf32, #tpu.memory_space<vmem>>, %arg10: memref<8x128xf32, #tpu.memory_space<vmem>>) attributes {dimension_semantics = [#tpu.dimension_semantics<parallel>, #tpu.dimension_semantics<arbitrary>], iteration_bounds = array<i64: 1, 1>, scalar_prefetch = 0 : i64, scratch_operands = 4 : i64, tpu.core_type = #tpu.core_type<tc>, window_params = [{transform_indices = @transform_0, window_bounds = array<i64: 8, 32>}, {transform_indices = @transform_1, window_bounds = array<i64: 8, 32>}, {pipeline_mode = #tpu.pipeline_mode<synchronous>, transform_indices = @transform_2, window_bounds = array<i64: 32, 128>}, {pipeline_mode = #tpu.pipeline_mode<synchronous>, transform_indices = @transform_3, window_bounds = array<i64: 32, 256>}, {transform_indices = @transform_4, window_bounds = array<i64: 8, 128>}]} {
    %c0_i32 = arith.constant 0 : i32
    %0 = arith.cmpi eq, %arg1, %c0_i32 : i32
    %1 = arith.extui %0 : i1 to i32
    %c0_i32_0 = arith.constant 0 : i32
    %2 = arith.cmpi ne, %1, %c0_i32_0 : i32
    scf.if %2 {
      %c0_26 = arith.constant 0 : index
      %c0_27 = arith.constant 0 : index
      %36 = vector.load %arg2[%c0_26, %c0_27] : memref<8x32xf32, #tpu.memory_space<vmem>>, vector<8x32xf32>
      %c0_28 = arith.constant 0 : index
      %c0_29 = arith.constant 0 : index
      %37 = vector.load %arg4[%c0_28, %c0_29] : memref<32x128xf32, #tpu.memory_space<vmem>>, vector<32x128xf32>
      %cst_30 = arith.constant dense<0.000000e+00> : vector<8x128xf32>
      %38 = tpu.matmul %36, %37, %cst_30 {dimension_numbers = #tpu.dot_dimension_numbers<[1], [0], [0], [1], [0, 0, 1, 1], [], []>} : vector<8x32xf32>, vector<32x128xf32>, vector<8x128xf32> -> vector<8x128xf32>
      %c0_31 = arith.constant 0 : index
      %c0_32 = arith.constant 0 : index
      %39 = vector.load %arg7[%c0_31, %c0_32] : memref<8x128xf32, #tpu.memory_space<vmem>>, vector<8x128xf32>
      tpu.vector_store %arg7[%c0_31, %c0_32], %38 {strides = array<i32>} : memref<8x128xf32, #tpu.memory_space<vmem>>, vector<8x128xf32>,
      %cst_33 = arith.constant 0xFF800000 : f32
      %40 = vector.broadcast %cst_33 : f32 to vector<8x1xf32>
      %c0_34 = arith.constant 0 : index
      %c0_35 = arith.constant 0 : index
      %41 = vector.load %arg8[%c0_34, %c0_35] : memref<8x1xf32, #tpu.memory_space<vmem>>, vector<8x1xf32>
      tpu.vector_store %arg8[%c0_34, %c0_35], %40 {strides = array<i32>} : memref<8x1xf32, #tpu.memory_space<vmem>>, vector<8x1xf32>,
      %cst_36 = arith.constant 0.000000e+00 : f32
      %42 = vector.broadcast %cst_36 : f32 to vector<8x1xf32>
      %c0_37 = arith.constant 0 : index
      %c0_38 = arith.constant 0 : index
      %43 = vector.load %arg9[%c0_37, %c0_38] : memref<8x1xf32, #tpu.memory_space<vmem>>, vector<8x1xf32>
      tpu.vector_store %arg9[%c0_37, %c0_38], %42 {strides = array<i32>} : memref<8x1xf32, #tpu.memory_space<vmem>>, vector<8x1xf32>,
      %cst_39 = arith.constant 0.000000e+00 : f32
      %44 = vector.broadcast %cst_39 : f32 to vector<8x128xf32>
      %c0_40 = arith.constant 0 : index
      %c0_41 = arith.constant 0 : index
      %45 = vector.load %arg10[%c0_40, %c0_41] : memref<8x128xf32, #tpu.memory_space<vmem>>, vector<8x128xf32>
      tpu.vector_store %arg10[%c0_40, %c0_41], %44 {strides = array<i32>} : memref<8x128xf32, #tpu.memory_space<vmem>>, vector<8x128xf32>,
    } else {
    }
    %c0 = arith.constant 0 : index
    %c0_1 = arith.constant 0 : index
    %3 = vector.load %arg3[%c0, %c0_1] : memref<8x32xf32, #tpu.memory_space<vmem>>, vector<8x32xf32>
    %c0_2 = arith.constant 0 : index
    %c0_3 = arith.constant 0 : index
    %4 = vector.load %arg5[%c0_2, %c0_3] : memref<32x256xf32, #tpu.memory_space<vmem>>, vector<32x256xf32>
    %cst = arith.constant dense<0.000000e+00> : vector<8x256xf32>
    %5 = tpu.matmul %3, %4, %cst {dimension_numbers = #tpu.dot_dimension_numbers<[1], [0], [0], [1], [0, 0, 1, 1], [], []>} : vector<8x32xf32>, vector<32x256xf32>, vector<8x256xf32> -> vector<8x256xf32>
    %6 = vector.extract_strided_slice %5 {offsets = [0, 0], sizes = [8, 128], strides = [1, 1]} : vector<8x256xf32> to vector<8x128xf32>
    %7 = vector.extract_strided_slice %5 {offsets = [0, 128], sizes = [8, 128], strides = [1, 1]} : vector<8x256xf32> to vector<8x128xf32>
    %c0_4 = arith.constant 0 : index
    %c0_5 = arith.constant 0 : index
    %8 = vector.load %arg7[%c0_4, %c0_5] : memref<8x128xf32, #tpu.memory_space<vmem>>, vector<8x128xf32>
    %cst_6 = arith.constant dense<0.000000e+00> : vector<8x8xf32>
    %9 = tpu.matmul %8, %6, %cst_6 {dimension_numbers = #tpu.dot_dimension_numbers<[1], [1], [0], [0], [0, 0, 1, 0], [], []>} : vector<8x128xf32>, vector<8x128xf32>, vector<8x8xf32> -> vector<8x8xf32>
    %c0_7 = arith.constant 0 : index
    %c0_8 = arith.constant 0 : index
    %10 = vector.load %arg8[%c0_7, %c0_8] : memref<8x1xf32, #tpu.memory_space<vmem>>, vector<8x1xf32>
    %cst_9 = arith.constant dense<0xFF800000> : vector<8xf32>
    %11 = vector.multi_reduction <maximumf>, %9, %cst_9 [1] : vector<8x8xf32> to vector<8xf32>
    %12 = vector.shape_cast %11 : vector<8xf32> to vector<8x1xf32>
    %13 = arith.maximumf %10, %12 : vector<8x1xf32>
    %c0_10 = arith.constant 0 : index
    %c0_11 = arith.constant 0 : index
    %14 = vector.load %arg8[%c0_10, %c0_11] : memref<8x1xf32, #tpu.memory_space<vmem>>, vector<8x1xf32>
    %15 = arith.subf %14, %13 : vector<8x1xf32>
    %16 = math.exp %15 : vector<8x1xf32>
    %17 = vector.broadcast %13 : vector<8x1xf32> to vector<8x8xf32>
    %18 = arith.subf %9, %17 : vector<8x8xf32>
    %19 = math.exp %18 : vector<8x8xf32>
    %c0_12 = arith.constant 0 : index
    %c0_13 = arith.constant 0 : index
    %20 = vector.load %arg9[%c0_12, %c0_13] : memref<8x1xf32, #tpu.memory_space<vmem>>, vector<8x1xf32>
    %21 = arith.mulf %16, %20 : vector<8x1xf32>
    %cst_14 = arith.constant dense<0.000000e+00> : vector<8xf32>
    %22 = vector.multi_reduction <add>, %19, %cst_14 [1] : vector<8x8xf32> to vector<8xf32>
    %23 = vector.shape_cast %22 : vector<8xf32> to vector<8x1xf32>
    %24 = arith.addf %21, %23 : vector<8x1xf32>
    %c0_15 = arith.constant 0 : index
    %c0_16 = arith.constant 0 : index
    %25 = vector.load %arg9[%c0_15, %c0_16] : memref<8x1xf32, #tpu.memory_space<vmem>>, vector<8x1xf32>
    tpu.vector_store %arg9[%c0_15, %c0_16], %24 {strides = array<i32>} : memref<8x1xf32, #tpu.memory_space<vmem>>, vector<8x1xf32>,
    %c0_17 = arith.constant 0 : index
    %c0_18 = arith.constant 0 : index
    %26 = vector.load %arg10[%c0_17, %c0_18] : memref<8x128xf32, #tpu.memory_space<vmem>>, vector<8x128xf32>
    %27 = vector.broadcast %16 : vector<8x1xf32> to vector<8x128xf32>
    %28 = arith.mulf %27, %26 : vector<8x128xf32>
    %cst_19 = arith.constant dense<0.000000e+00> : vector<8x128xf32>
    %29 = tpu.matmul %19, %7, %cst_19 {dimension_numbers = #tpu.dot_dimension_numbers<[1], [0], [0], [1], [0, 0, 1, 1], [], []>} : vector<8x8xf32>, vector<8x128xf32>, vector<8x128xf32> -> vector<8x128xf32>
    %30 = arith.addf %28, %29 : vector<8x128xf32>
    %c0_20 = arith.constant 0 : index
    %c0_21 = arith.constant 0 : index
    %31 = vector.load %arg10[%c0_20, %c0_21] : memref<8x128xf32, #tpu.memory_space<vmem>>, vector<8x128xf32>
    tpu.vector_store %arg10[%c0_20, %c0_21], %30 {strides = array<i32>} : memref<8x128xf32, #tpu.memory_space<vmem>>, vector<8x128xf32>,
    %c0_22 = arith.constant 0 : index
    %c0_23 = arith.constant 0 : index
    %32 = vector.load %arg8[%c0_22, %c0_23] : memref<8x1xf32, #tpu.memory_space<vmem>>, vector<8x1xf32>
    tpu.vector_store %arg8[%c0_22, %c0_23], %13 {strides = array<i32>} : memref<8x1xf32, #tpu.memory_space<vmem>>, vector<8x1xf32>,
    %c0_i32_24 = arith.constant 0 : i32
    %33 = arith.cmpi eq, %arg1, %c0_i32_24 : i32
    %34 = arith.extui %33 : i1 to i32
    %c0_i32_25 = arith.constant 0 : i32
    %35 = arith.cmpi ne, %34, %c0_i32_25 : i32
    scf.if %35 {
      %c0_26 = arith.constant 0 : index
      %c0_27 = arith.constant 0 : index
      %36 = vector.load %arg10[%c0_26, %c0_27] : memref<8x128xf32, #tpu.memory_space<vmem>>, vector<8x128xf32>
      %c0_28 = arith.constant 0 : index
      %c0_29 = arith.constant 0 : index
      %37 = vector.load %arg9[%c0_28, %c0_29] : memref<8x1xf32, #tpu.memory_space<vmem>>, vector<8x1xf32>
      %38 = tpu.reciprocal %37 {approx = true} : vector<8x1xf32> -> vector<8x1xf32>
      %39 = vector.broadcast %38 : vector<8x1xf32> to vector<8x128xf32>
      %40 = arith.mulf %36, %39 : vector<8x128xf32>
      %c0_30 = arith.constant 0 : index
      %c0_31 = arith.constant 0 : index
      %41 = vector.load %arg6[%c0_30, %c0_31] : memref<8x128xf32, #tpu.memory_space<vmem>>, vector<8x128xf32>
      tpu.vector_store %arg6[%c0_30, %c0_31], %40 {strides = array<i32>} : memref<8x128xf32, #tpu.memory_space<vmem>>, vector<8x128xf32>,
    } else {
    }
    return
  }
  func.func @transform_0(%arg0: i32, %arg1: i32) -> (i32, i32) {
    %c0_i32 = arith.constant 0 : i32
    %c0_i32_0 = arith.constant 0 : i32
    return %arg0, %c0_i32 : i32, i32
  }
  func.func @transform_1(%arg0: i32, %arg1: i32) -> (i32, i32) {
    %c0_i32 = arith.constant 0 : i32
    %c0_i32_0 = arith.constant 0 : i32
    return %arg1, %c0_i32 : i32, i32
  }
  func.func @transform_2(%arg0: i32, %arg1: i32) -> (i32, i32) {
    %c0_i32 = arith.constant 0 : i32
    %c0_i32_0 = arith.constant 0 : i32
    %c0_i32_1 = arith.constant 0 : i32
    return %c0_i32, %c0_i32_0 : i32, i32
  }
  func.func @transform_3(%arg0: i32, %arg1: i32) -> (i32, i32) {
    %c0_i32 = arith.constant 0 : i32
    %c0_i32_0 = arith.constant 0 : i32
    %c0_i32_1 = arith.constant 0 : i32
    return %c0_i32, %c0_i32_0 : i32, i32
  }
  func.func @transform_4(%arg0: i32, %arg1: i32) -> (i32, i32) {
    %c0_i32 = arith.constant 0 : i32
    %c0_i32_0 = arith.constant 0 : i32
    return %arg0, %c0_i32 : i32, i32
  }
}

</mosaic_0001>

<llo_original>
// kernel: tpu_custom_call.1
$region0: #{tpu_custom_call.1}
  #allocation0 [shape = 'u32[]', space=smem, size = 0x4, offset = 0x4, fixed_abs, tag = 'smem constant byte address 0x4 - core index']
  #allocation1 [shape = 'u32[72,128]{1,0:T(1,128)}', space=vmem, size = 0x9000, scoped, tag = 'internal scratch']
  #allocation2 [shape = 'f32[8,128]{1,0:T(8,128)}', space=vmem, size = 0x1000, scoped, tag = 'scratch operand']
  #allocation3 [shape = 'f32[8,1]{1,0:T(8,128)}', space=vmem, size = 0x1000, scoped, tag = 'scratch operand']
  #allocation4 [shape = 'f32[8,1]{1,0:T(8,128)}', space=vmem, size = 0x1000, scoped, tag = 'scratch operand']
  #allocation5 [shape = 'f32[8,128]{1,0:T(8,128)}', space=vmem, size = 0x1000, scoped, tag = 'scratch operand']
  %s0 = inlined_call_operand.hbm [shape: f32[8,32], index: 0, kind: input, shape index: {}]
  %s1 = inlined_call_operand.hbm [shape: f32[8,32], index: 1, kind: input, shape index: {}]
  %s2 = inlined_call_operand.hbm [shape: f32[32,128], index: 2, kind: input, shape index: {}]
  %s3 = inlined_call_operand.hbm [shape: f32[32,256], index: 3, kind: input, shape index: {}]
  %s4 = inlined_call_operand.hbm [shape: f32[8,128], index: 4, kind: output, shape index: {}]
  %s5 = sld [smem:[#allocation0]]
  $region50: #{tpu_custom_call.1} parent=0
    _
  %s7 = ssub.s32 1, %s5
  %s8 = scalar_select 0, %s7, %s5
  $region1: #{tpu_custom_call.1} parent=0
    #allocation6 [shape = 'u8[4096]{0}', space=vmem, size = 0x1000, scoped, tag = 'input window, operand 0, single buffered']
    #allocation7 [shape = 's32[1]{0}', space=sflag, size = 0x4, scoped, tag = 'scoped memory for tpu_custom_call.1']
    #allocation8 [shape = 's32[1]{0}', space=sflag, size = 0x4, scoped, tag = 'scoped memory for tpu_custom_call.1']
    #allocation9 [shape = 'u8[4096]{0}', space=vmem, size = 0x1000, scoped, tag = 'input window, operand 1, single buffered']
    #allocation10 [shape = 's32[1]{0}', space=sflag, size = 0x4, scoped, tag = 'scoped memory for tpu_custom_call.1']
    #allocation11 [shape = 'u8[16384]{0}', space=vmem, size = 0x4000, scoped, tag = 'input window, operand 2, single buffered']
    #allocation12 [shape = 'u8[32768]{0}', space=vmem, size = 0x8000, scoped, tag = 'input window, operand 3, single buffered']
    #allocation13 [shape = 's32[1]{0}', space=sflag, size = 0x4, scoped, tag = 'scoped memory for tpu_custom_call.1']
    #allocation14 [shape = 'u8[4096]{0}', space=vmem, size = 0x1000, scoped, tag = 'output window, operand 0, single buffered']
    %9 = vsyncpa [#allocation7], 0
    %10 = vsyncpa [#allocation10], 0
    %11 = vsyncpa [#allocation13], 0
    %12 = vsyncpa [#allocation8], 0
    // Predicated region
    $region2: #{tpu_custom_call.1} parent=1 // pred_check
      _
    $region3: #{tpu_custom_call.1} parent=1 // pred_check_branch
      %14 = sbr.rel (0) target = $region5
    $region4: #{tpu_custom_call.1} parent=1 // pred_region
      %16 = vsyncadd [#allocation7], 0
      %s18 = sshll.u32 %s0, 4
      %s19 = int_to_ptr.hbm [resolvable:$true] %s18
      %s20 = sshll.u32 [#allocation6], 4
      %s21 = int_to_ptr.vmem [resolvable:$true] %s20
      %23 = dma.hbm_to_vmem [thread:$0]  %s19, 128, %s21, [#allocation7]
    $region5: #{tpu_custom_call.1} parent=1 // pred_fallthru
      _
    // Predicated region
    $region6: #{tpu_custom_call.1} parent=1 // pred_check
      _
    $region7: #{tpu_custom_call.1} parent=1 // pred_check_branch
      %25 = sbr.rel (0) target = $region9
    $region8: #{tpu_custom_call.1} parent=1 // pred_region
      %27 = vsyncadd [#allocation10], 0
      %s29 = sshll.u32 %s1, 4
      %s30 = int_to_ptr.hbm [resolvable:$true] %s29
      %s31 = sshll.u32 [#allocation9], 4
      %s32 = int_to_ptr.vmem [resolvable:$true] %s31
      %34 = dma.hbm_to_vmem [thread:$0]  %s30, 128, %s32, [#allocation10]
    $region9: #{tpu_custom_call.1} parent=1 // pred_fallthru
      _
    // Predicated region
    $region10: #{tpu_custom_call.1} parent=1 // pred_check
      _
    $region11: #{tpu_custom_call.1} parent=1 // pred_check_branch
      %36 = sbr.rel (0) target = $region13
    $region12: #{tpu_custom_call.1} parent=1 // pred_region
      %38 = vsyncadd [#allocation10], 0
      %s39 = sshll.u32 %s2, 4
      %s40 = int_to_ptr.hbm [resolvable:$true] %s39
      %s41 = sshll.u32 [#allocation11], 4
      %s42 = int_to_ptr.vmem [resolvable:$true] %s41
      %47 = dma.hbm_to_vmem [thread:$0]  %s40, 512, %s42, [#allocation10], 128, 128, 8
    $region13: #{tpu_custom_call.1} parent=1 // pred_fallthru
      _
    // Predicated region
    $region14: #{tpu_custom_call.1} parent=1 // pred_check
      _
    $region15: #{tpu_custom_call.1} parent=1 // pred_check_branch
      %49 = sbr.rel (0) target = $region17
    $region16: #{tpu_custom_call.1} parent=1 // pred_region
      %51 = vsyncadd [#allocation13], 0
      %s52 = sshll.u32 %s3, 4
      %s53 = int_to_ptr.hbm [resolvable:$true] %s52
      %s54 = sshll.u32 [#allocation12], 4
      %s55 = int_to_ptr.vmem [resolvable:$true] %s54
      %60 = dma.hbm_to_vmem [thread:$0]  %s53, 1024, %s55, [#allocation13], 256, 256, 16
    $region17: #{tpu_custom_call.1} parent=1 // pred_fallthru
      _
    // Predicated region
    $region18: #{tpu_custom_call.1} parent=1 // pred_check
      _
    $region19: #{tpu_custom_call.1} parent=1 // pred_check_branch
      %62 = sbr.rel (0) target = $region21
    $region20: #{tpu_custom_call.1} parent=1 // pred_region
      %64 = dma.done [#allocation7], 128
    $region21: #{tpu_custom_call.1} parent=1 // pred_fallthru
      _
    // Predicated region
    $region22: #{tpu_custom_call.1} parent=1 // pred_check
      _
    $region23: #{tpu_custom_call.1} parent=1 // pred_check_branch
      %66 = sbr.rel (0) target = $region25
    $region24: #{tpu_custom_call.1} parent=1 // pred_region
      %68 = dma.done [#allocation10], 128
    $region25: #{tpu_custom_call.1} parent=1 // pred_fallthru
      _
    // Predicated region
    $region26: #{tpu_custom_call.1} parent=1 // pred_check
      _
    $region27: #{tpu_custom_call.1} parent=1 // pred_check_branch
      %70 = sbr.rel (0) target = $region29
    $region28: #{tpu_custom_call.1} parent=1 // pred_region
      %72 = dma.done [#allocation10], 512
    $region29: #{tpu_custom_call.1} parent=1 // pred_fallthru
      _
    // Predicated region
    $region30: #{tpu_custom_call.1} parent=1 // pred_check
      _
    $region31: #{tpu_custom_call.1} parent=1 // pred_check_branch
      %74 = sbr.rel (0) target = $region33
    $region32: #{tpu_custom_call.1} parent=1 // pred_region
      %76 = dma.done [#allocation13], 1024
    $region33: #{tpu_custom_call.1} parent=1 // pred_fallthru
      _
    %p77 = scmp.eq.s32.totalorder 0, 0
    // Predicated region
    $region34: #{tpu_custom_call.1} parent=1 // pred_check
      %p78 = pneg %p77
    $region35: #{tpu_custom_call.1} parent=1 // pred_check_branch
      %80 = sbr.rel (%p78) target = $region37
    $region36: #{tpu_custom_call.1} parent=1 // pred_region
      %v81 = vld [vmem:[#allocation6] sm:$0xff]
      %v82 = vld [vmem:[#allocation11] sm:$0xff]
      %v83 = vld [vmem:[#allocation11 + $0x8] sm:$0xff]
      %v84 = vld [vmem:[#allocation11 + $0x10] sm:$0xff]
      %v85 = vld [vmem:[#allocation11 + $0x18] sm:$0xff]
      %vm86 = vcmask 261120
      %v88 = vsel %vm86, %v81, 0
      %90 = vmatpush.msra.mxu0 0.0
      %91 = vmatpush.msra.mxu0 0.0
      %92 = vmatpush.msra.mxu0 0.0
      %93 = vmatpush.msra.mxu0 0.0
      %94 = vmatpush.msra.mxu0 0.0
      %95 = vmatpush.msra.mxu0 0.0
      %96 = vmatpush.msra.mxu0 0.0
      %97 = vmatpush.msra.mxu0 0.0
      %98 = vmatpush.msra.mxu0 0.0
      %99 = vmatpush.msra.mxu0 0.0
      %100 = vmatpush.msra.mxu0 0.0
      %101 = vmatpush.msra.mxu0 0.0
      %102 = vmatpush.msra.mxu0 %v85
      %103 = vmatpush.msra.mxu0 %v84
      %104 = vmatpush.msra.mxu0 %v83
      %105 = vmatpush.msra.mxu0 %v82
      %106 = vmatmul.f32.gmra.mxu0 %v88
      %v107 = vpop.f32.mrf.mxu0
      %v108 = vadd.f32 0.0, %v107
      %109 = vdwg.mxu0
      %110 = vst [vmem:[#allocation2] sm:$0xff] %v108
      %vm111 = vcmask 7168
      %112 = vst.msk [vmem:[#allocation3] sm:$0xff] %vm111, -inf
      %113 = vst.msk [vmem:[#allocation4] sm:$0xff] %vm111, 0.0
      %114 = vst [vmem:[#allocation5] sm:$0xff] 0.0
    $region37: #{tpu_custom_call.1} parent=1 // pred_fallthru
      _
    %v115 = vld [vmem:[#allocation9] sm:$0xff]
    %v116 = vld [vmem:[#allocation12] sm:$0xff]
    %v117 = vld [vmem:[#allocation12 + $0x8] sm:$0xff]
    %v118 = vld [vmem:[#allocation12 + $0x10] sm:$0xff]
    %v119 = vld [vmem:[#allocation12 + $0x18] sm:$0xff]
    %v120 = vld [vmem:[#allocation12 + $0x20] sm:$0xff]
    %v121 = vld [vmem:[#allocation12 + $0x28] sm:$0xff]
    %v122 = vld [vmem:[#allocation12 + $0x30] sm:$0xff]
    %v123 = vld [vmem:[#allocation12 + $0x38] sm:$0xff]
    %vm124 = vcmask 261120
    %v126 = vsel %vm124, %v115, 0
    %128 = vmatpush.msra.mxu0 0.0
    %129 = vmatpush.msra.mxu0 0.0
    %130 = vmatpush.msra.mxu0 0.0
    %131 = vmatpush.msra.mxu0 0.0
    %132 = vmatpush.msra.mxu0 0.0
    %133 = vmatpush.msra.mxu0 0.0
    %134 = vmatpush.msra.mxu0 0.0
    %135 = vmatpush.msra.mxu0 0.0
    %136 = vmatpush.msra.mxu0 0.0
    %137 = vmatpush.msra.mxu0 0.0
    %138 = vmatpush.msra.mxu0 0.0
    %139 = vmatpush.msra.mxu0 0.0
    %140 = vmatpush.msra.mxu0 %v122
    %141 = vmatpush.msra.mxu0 %v120
    %142 = vmatpush.msra.mxu0 %v118
    %143 = vmatpush.msra.mxu0 %v116
    %144 = vmatmul.f32.gmra.mxu0 %v126
    %v145 = vpop.f32.mrf.mxu0
    %v146 = vadd.f32 0.0, %v145
    %147 = vdwg.mxu0
    %148 = vmatpush.msra.mxu0 0.0
    %149 = vmatpush.msra.mxu0 0.0
    %150 = vmatpush.msra.mxu0 0.0
    %151 = vmatpush.msra.mxu0 0.0
    %152 = vmatpush.msra.mxu0 0.0
    %153 = vmatpush.msra.mxu0 0.0
    %154 = vmatpush.msra.mxu0 0.0
    %155 = vmatpush.msra.mxu0 0.0
    %156 = vmatpush.msra.mxu0 0.0
    %157 = vmatpush.msra.mxu0 0.0
    %158 = vmatpush.msra.mxu0 0.0
    %159 = vmatpush.msra.mxu0 0.0
    %160 = vmatpush.msra.mxu0 %v123
    %161 = vmatpush.msra.mxu0 %v121
    %162 = vmatpush.msra.mxu0 %v119
    %163 = vmatpush.msra.mxu0 %v117
    %164 = vmatmul.f32.gmra.mxu0 %v126
    %v165 = vpop.f32.mrf.mxu0
    %v166 = vadd.f32 0.0, %v165
    %167 = vdwg.mxu0
    %v168 = vld [vmem:[#allocation2] sm:$0xff]
    %169 = vmatpush.xpose.msra.mxu0 0.0
    %170 = vmatpush.xpose.msra.mxu0 0.0
    %171 = vmatpush.xpose.msra.mxu0 0.0
    %172 = vmatpush.xpose.msra.mxu0 0.0
    %173 = vmatpush.xpose.msra.mxu0 0.0
    %174 = vmatpush.xpose.msra.mxu0 0.0
    %175 = vmatpush.xpose.msra.mxu0 0.0
    %176 = vmatpush.xpose.msra.mxu0 0.0
    %177 = vmatpush.xpose.msra.mxu0 0.0
    %178 = vmatpush.xpose.msra.mxu0 0.0
    %179 = vmatpush.xpose.msra.mxu0 0.0
    %180 = vmatpush.xpose.msra.mxu0 0.0
    %181 = vmatpush.xpose.msra.mxu0 0.0
    %182 = vmatpush.xpose.msra.mxu0 0.0
    %183 = vmatpush.xpose.msra.mxu0 0.0
    %184 = vmatpush.xpose.msra.mxu0 %v146
    %185 = vmatmul.f32.gmra.mxu0 %v168
    %v186 = vpop.f32.mrf.mxu0
    %v187 = vadd.f32 0.0, %v186
    %188 = vdwg.mxu0
    %v189 = vld [vmem:[#allocation3] sm:$0xff]
    %vm190 = vcmask 64512
    %v191 = vsel %vm190, %v187, -inf
    %192 = vmax.xlane.f32.xlu0 %v191
    %v193 = vpop.xlane.xlu0 %192
    %v194 = vmax.f32 %v189, %v193
    %v195 = vsub.f32 %v189, %v194
    %v196 = vmul.f32 %v195, 1.442695
    %v197 = vpow.pop %v196
    %199 = vset.pattern.permute.xlu0 0
    %200 = vperm.xlu0 %199, %v194
    %v201 = vpop.permute.xlu0 %200
    %v203 = vsub.f32 %v187, %v201
    %v204 = vmul.f32 %v203, 1.442695
    %v205 = vpow.pop %v204
    %v206 = vld [vmem:[#allocation4] sm:$0xff]
    %v207 = vmul.f32 %v197, %v206
    %v208 = vsel %vm190, %v205, 0.0
    %209 = vadd.xlane.f32.xlu0 %v208
    %v210 = vpop.xlane.xlu0 %209
    %v211 = vadd.f32 %v207, %v210
    %vm212 = vcmask 7168
    %213 = vst.msk [vmem:[#allocation4] sm:$0xff] %vm212, %v211
    %v214 = vld [vmem:[#allocation5] sm:$0xff]
    %216 = vset.pattern.permute.xlu0 0
    %217 = vperm.xlu0 %216, %v197
    %v218 = vpop.permute.xlu0 %217
    %v220 = vmul.f32 %v218, %v214
    %v222 = vsel %vm190, %v205, 0
    %224 = vmatpush.msra.mxu0 0.0
    %225 = vmatpush.msra.mxu0 0.0
    %226 = vmatpush.msra.mxu0 0.0
    %227 = vmatpush.msra.mxu0 0.0
    %228 = vmatpush.msra.mxu0 0.0
    %229 = vmatpush.msra.mxu0 0.0
    %230 = vmatpush.msra.mxu0 0.0
    %231 = vmatpush.msra.mxu0 0.0
    %232 = vmatpush.msra.mxu0 0.0
    %233 = vmatpush.msra.mxu0 0.0
    %234 = vmatpush.msra.mxu0 0.0
    %235 = vmatpush.msra.mxu0 0.0
    %236 = vmatpush.msra.mxu0 0.0
    %237 = vmatpush.msra.mxu0 0.0
    %238 = vmatpush.msra.mxu0 0.0
    %239 = vmatpush.msra.mxu0 %v166
    %240 = vmatmul.f32.gmra.mxu0 %v222
    %v241 = vpop.f32.mrf.mxu0
    %v242 = vadd.f32 0.0, %v241
    %243 = vdwg.mxu0
    %v244 = vadd.f32 %v220, %v242
    %245 = vst [vmem:[#allocation5] sm:$0xff] %v244
    %246 = vst.msk [vmem:[#allocation3] sm:$0xff] %vm212, %v194
    // Predicated region
    $region38: #{tpu_custom_call.1} parent=1 // pred_check
      %p247 = pneg %p77
    $region39: #{tpu_custom_call.1} parent=1 // pred_check_branch
      %249 = sbr.rel (%p247) target = $region41
    $region40: #{tpu_custom_call.1} parent=1 // pred_region
      %v250 = vld [vmem:[#allocation5] sm:$0xff]
      %v251 = vld [vmem:[#allocation4] sm:$0xff]
      %v252 = vrcp.pop %v251
      %254 = vset.pattern.permute.xlu0 0
      %255 = vperm.xlu0 %254, %v252
      %v256 = vpop.permute.xlu0 %255
      %v258 = vmul.f32 %v250, %v256
      %259 = vst [vmem:[#allocation14] sm:$0xff] %v258
    $region41: #{tpu_custom_call.1} parent=1 // pred_fallthru
      _
    // Predicated region
    $region42: #{tpu_custom_call.1} parent=1 // pred_check
      _
    $region43: #{tpu_custom_call.1} parent=1 // pred_check_branch
      %261 = sbr.rel (0) target = $region45
    $region44: #{tpu_custom_call.1} parent=1 // pred_region
      %263 = vsyncadd [#allocation8], 0
      %s265 = sshll.u32 [#allocation14], 4
      %s266 = int_to_ptr.vmem [resolvable:$true] %s265
      %s267 = sshll.u32 %s4, 4
      %s268 = int_to_ptr.hbm [resolvable:$true] %s267
      %270 = dma.vmem_to_hbm [thread:$0]  %s266, 128, %s268, [#allocation8]
    $region45: #{tpu_custom_call.1} parent=1 // pred_fallthru
      _
    // Predicated region
    $region46: #{tpu_custom_call.1} parent=1 // pred_check
      _
    $region47: #{tpu_custom_call.1} parent=1 // pred_check_branch
      %272 = sbr.rel (0) target = $region49
    $region48: #{tpu_custom_call.1} parent=1 // pred_region
      %274 = dma.done [#allocation8], 128
    $region49: #{tpu_custom_call.1} parent=1 // pred_fallthru
      _
    %275 = vsyncpa [#allocation7], 1
    %276 = vsyncpa [#allocation10], 1
    %277 = vsyncpa [#allocation13], 1
    %278 = vsyncpa [#allocation8], 1

</llo_original>
